<compile_context>
chip_gen: v7x
topology: tpu7x:2x2x1
jax: 0.10.0
libtpu: 0.0.40
codegen_flags: <defaults>
</compile_context>

<pallas_src>
import functools
import math

import numpy as np
import jax
import jax.numpy as jnp
from jax import lax
from jax.experimental import pallas as pl
from jax.experimental.pallas import tpu as pltpu


# ---------------------------------------------------------------------------
# Fused LocalMHA kernel.
# Grid = (B, Wblocks).  Each step:
#   x block (1, R, hidden) --MXU--> qkv (R, 3*op_size)  [R = Wb * window_size]
#   per head: rope(q), rope(k); K/V written into a (Wb+1)-window VMEM context whose
#   first window is carried from the previous step (or -1 fill at block 0);
#   banded causal/exact-window attention over that context; lane-dense output store.
# ---------------------------------------------------------------------------
def _fused_local_mha_kernel(x_ref, w_ref, cos_ref, sin_ref, o_ref,
                            kctx_ref, vctx_ref, *,
                            window_size, head_dim, op_heads, windows_per_block,
                            needed_pad, compute_dtype):
    ws, d, nh, Wb = window_size, head_dim, op_heads, windows_per_block
    half = d // 2
    R = Wb * ws              # query rows handled this grid step
    C = (Wb + 1) * ws        # context rows: 1 look-back window + Wb block windows
    op_size = nh * d
    wb = pl.program_id(1)
    scale = float(d) ** -0.5
    neg = jnp.float32(-jnp.finfo(jnp.float32).max)

    # ---- look-back context carry (sequential `wb` axis; scratch persists) ----
    @pl.when(wb == 0)
    def _():
        # look_around pad (pad_value = -1); inserted AFTER rotary in the reference,
        # so it is stored un-rotated.
        kctx_ref[:, 0:ws, :] = jnp.full((nh, ws, d), -1.0, dtype=kctx_ref.dtype)
        vctx_ref[:, 0:ws, :] = jnp.full((nh, ws, d), -1.0, dtype=vctx_ref.dtype)

    @pl.when(wb > 0)
    def _():
        # previous block's last (already-roped) K/V window becomes this block's
        # look-back window -> every K/V row is fetched and roped exactly once.
        kctx_ref[:, 0:ws, :] = kctx_ref[:, R:C, :]
        vctx_ref[:, 0:ws, :] = vctx_ref[:, R:C, :]

    # ---- fused QKV projection for the whole window block (bf16 MXU, f32 acc) ----
    x = x_ref[0]                                           # (R, hidden), compute dtype
    qkv = jnp.dot(x, w_ref[...], preferred_element_type=jnp.float32)  # (R, 3*op_size)

    cos = cos_ref[...]                                     # (R, d) f32 hoisted tables
    sin = sin_ref[...]

    def rope(t):                                           # t: (R, d) f32
        t_rot = jnp.concatenate([-t[:, half:], t[:, :half]], axis=-1)
        return t * cos + t_rot * sin

    # ---- masks (shared across heads): causal + exact window + look_around pad ----
    q_pos = wb * R + lax.broadcasted_iota(jnp.int32, (R, C), 0)
    k_pos = wb * R - ws + lax.broadcasted_iota(jnp.int32, (R, C), 1)
    bq_k = jnp.where(k_pos < 0, -1, k_pos)                 # fill positions -> pad_value -1
    mask = (q_pos < bq_k) | (q_pos > bq_k + ws)            # causal | exact_windowsize
    if needed_pad:                                         # torch applies only when padded
        mask = mask | (bq_k == -1)

    # ---- per-head attention over the banded context ----
    for h in range(nh):
        q_h = rope(qkv[:, h * d:(h + 1) * d])
        k_h = rope(qkv[:, op_size + h * d:op_size + (h + 1) * d])
        v_h = qkv[:, 2 * op_size + h * d:2 * op_size + (h + 1) * d]

        kctx_ref[h, ws:C, :] = k_h.astype(kctx_ref.dtype)
        vctx_ref[h, ws:C, :] = v_h.astype(vctx_ref.dtype)

        kc = kctx_ref[h]                                   # (C, d), compute dtype
        vc = vctx_ref[h]                                   # (C, d)

        sim = lax.dot_general(q_h.astype(compute_dtype), kc,
                              (((1,), (1,)), ((), ())),
                              preferred_element_type=jnp.float32) * scale  # (R, C)
        sim = jnp.where(mask, neg, sim)
        m = jnp.max(sim, axis=-1, keepdims=True)
        p = jnp.exp(sim - m)
        l = jnp.sum(p, axis=-1, keepdims=True)
        out_h = jnp.dot(p.astype(compute_dtype), vc,
                        preferred_element_type=jnp.float32)               # (R, d)
        out_h = out_h * pl.reciprocal(l, approx=True)
        # lane-dense output block: head h occupies lanes [h*d, (h+1)*d)
        o_ref[0, :, h * d:(h + 1) * d] = out_h.astype(o_ref.dtype)


def local_mha_forward(hidden, w_qkv, *, window_size, op_heads, head_size,
                      compute_dtype=jnp.bfloat16, target_block_rows=256):
    """Pallas implementation of LocalMHA.forward (prenorm=False, use_rotary=True).

    hidden: (B, N, hidden_size) float32
    w_qkv:  (3*op_size, hidden_size) float32  (torch Linear weight layout)
    returns (out, None) with out: (B, N, op_size) float32
    """
    B, N, hsz = hidden.shape
    d = head_size
    ws = window_size
    op_size = op_heads * d
    assert d % 2 == 0, "rotary embedding needs an even head size"
    assert w_qkv.shape == (3 * op_size, hsz)

    # ---- pick windows-per-block so each grid step handles ~target_block_rows rows ----
    W0 = -(-N // ws)                               # natural number of windows
    mult = 8 // math.gcd(ws, 8)                    # keep block rows sublane(8)-aligned
    Wb = min(max(1, target_block_rows // ws), W0)
    Wb = mult * (-(-Wb // mult))
    Wblocks = -(-W0 // Wb)
    n_pad = Wblocks * Wb * ws
    R = Wb * ws
    needed_pad = (N % ws) != 0                     # reference autopad flag (semantics!)

    # Zero-pad the sequence up to a whole number of window blocks.  Projection and
    # rope of zero rows stay zero; the extra windows only feed query rows that are
    # sliced off below and keys that no real query can see (causal + window band).
    x = hidden
    if n_pad > N:
        x = jnp.pad(x, ((0, 0), (0, n_pad - N), (0, 0)))
    x = x.astype(compute_dtype)
    wt = jnp.asarray(w_qkv).T.astype(compute_dtype)        # (hidden, 3*op_size)

    # ---- rotary tables hoisted out of the kernel (SinusoidalEmbeddings) ----
    inv_freq = 1.0 / (10000.0 ** (jnp.arange(0, d, 2, dtype=jnp.float32) / d))
    pos = jnp.arange(n_pad, dtype=jnp.float32)
    freqs = pos[:, None] * inv_freq[None, :]               # (n_pad, d/2)
    theta = jnp.concatenate([freqs, freqs], axis=-1)       # (n_pad, d)
    cos_t = jnp.cos(theta)
    sin_t = jnp.sin(theta)

    kernel = functools.partial(
        _fused_local_mha_kernel,
        window_size=ws, head_dim=d, op_heads=op_heads, windows_per_block=Wb,
        needed_pad=needed_pad, compute_dtype=compute_dtype)

    out = pl.pallas_call(
        kernel,
        out_shape=jax.ShapeDtypeStruct((B, n_pad, op_size), jnp.float32),
        grid_spec=pltpu.PrefetchScalarGridSpec(
            num_scalar_prefetch=0,
            grid=(B, Wblocks),
            in_specs=[
                pl.BlockSpec((1, R, hsz), lambda b, w: (b, w, 0)),        # hidden block
                pl.BlockSpec((hsz, 3 * op_size), lambda b, w: (0, 0)),    # resident W_qkv
                pl.BlockSpec((R, d), lambda b, w: (w, 0)),                # cos table
                pl.BlockSpec((R, d), lambda b, w: (w, 0)),                # sin table
            ],
            out_specs=pl.BlockSpec((1, R, op_size), lambda b, w: (b, w, 0)),
            scratch_shapes=[
                pltpu.VMEM((op_heads, (Wb + 1) * ws, d), compute_dtype),  # K context/carry
                pltpu.VMEM((op_heads, (Wb + 1) * ws, d), compute_dtype),  # V context/carry
            ]),
        compiler_params=pltpu.CompilerParams(
            # batch axis parallel (megacore / v7x 2-TC sharding); window-block axis is
            # sequential because it carries the look-back K/V context in scratch.
            dimension_semantics=("parallel", "arbitrary")),
    )(x, wt, cos_t, sin_t)

    out = out[:, :N, :]                                    # drop autopad tail
    return out, None


# ---------------------------------------------------------------------------
# Pure-JAX reference (line-for-line translation of the torch module) for checking.
# ---------------------------------------------------------------------------
def reference_forward(hidden, w_qkv, *, window_size, op_heads, head_size):
    B, N, _ = hidden.shape
    d = head_size
    ws = window_size
    BH = B * op_heads
    hp = jax.lax.Precision.HIGHEST

    qkv = jnp.dot(hidden, w_qkv.T, precision=hp)
    q, k, v = jnp.split(qkv, 3, axis=-1)
    q, k, v = (t.reshape(B, N, op_heads, d).transpose(0, 2, 1, 3).reshape(BH, N, d)
               for t in (q, k, v))

    # rotary
    inv_freq = 1.0 / (10000.0 ** (jnp.arange(0, d, 2).astype(jnp.float32) / d))
    t_pos = jnp.arange(N).astype(jnp.float32)
    freqs = jnp.einsum('i,j->ij', t_pos, inv_freq)
    freqs = jnp.concatenate([freqs, freqs], axis=-1)          # (N, d)

    def rot_half(x):
        return jnp.concatenate([-x[..., d // 2:], x[..., :d // 2]], axis=-1)

    q = q * jnp.cos(freqs) + rot_half(q) * jnp.sin(freqs)
    k = k * jnp.cos(freqs) + rot_half(k) * jnp.sin(freqs)

    pad = (-N) % ws
    needed_pad = pad > 0
    if needed_pad:
        pad_cfg = ((0, 0), (0, pad), (0, 0))
        q = jnp.pad(q, pad_cfg)
        k = jnp.pad(k, pad_cfg)
        v = jnp.pad(v, pad_cfg)
    n = N + pad
    W = n // ws
    scale = d ** (-0.5)

    b_t = jnp.arange(n).reshape(1, W, ws)
    bq = q.reshape(BH, W, ws, d)
    bk = k.reshape(BH, W, ws, d)
    bv = v.reshape(BH, W, ws, d)

    def look_around(x, pad_value):
        pad_width = [(0, 0)] * x.ndim
        pad_width[1] = (1, 0)                                  # backward=1, forward=0
        px = jnp.pad(x, pad_width, constant_values=pad_value)
        return jnp.concatenate([px[:, 0:W], px[:, 1:W + 1]], axis=2)

    bk = look_around(bk, -1.0)
    bv = look_around(bv, -1.0)
    bq_k = look_around(b_t, -1)                                # (1, W, 2*ws)
    bq_t = b_t[..., :, None]                                   # (1, W, ws, 1)
    bq_k = bq_k[..., None, :]                                  # (1, W, 1, 2*ws)

    sim = jnp.einsum('bhie,bhje->bhij', bq, bk, precision=hp) * scale
    neg = -jnp.finfo(jnp.float32).max
    causal_mask = (bq_t < bq_k) | (bq_t > bq_k + ws * 1)       # exact_windowsize
    sim = jnp.where(causal_mask, neg, sim)
    if needed_pad:
        sim = jnp.where(bq_k == -1, neg, sim)
    attn = jax.nn.softmax(sim, axis=-1)
    out = jnp.einsum('bhij,bhje->bhie', attn, bv, precision=hp)
    out = out.reshape(BH, n, d)[:, :N, :]
    out = out.reshape(B, op_heads, N, d).transpose(0, 2, 1, 3).reshape(B, N, op_heads * d)
    return out


def _run_case(key, *, B, N, hidden_size, total_heads, op_heads, window_size,
              target_block_rows):
    head_size = hidden_size // total_heads
    op_size = head_size * op_heads
    k1, k2 = jax.random.split(key)
    hidden_states = jax.random.normal(k1, (B, N, hidden_size), dtype=jnp.float32)
    w_qkv = 0.02 * jax.random.normal(k2, (3 * op_size, hidden_size), dtype=jnp.float32)

    out, _ = local_mha_forward(hidden_states, w_qkv,
                               window_size=window_size,
                               op_heads=op_heads, head_size=head_size,
                               target_block_rows=target_block_rows)
    out = jax.block_until_ready(out)
    assert out.shape == (B, N, op_size)

    ref = reference_forward(hidden_states, w_qkv,
                            window_size=window_size,
                            op_heads=op_heads, head_size=head_size)
    # bf16 MXU matmuls (f32 accumulation) vs f32 HIGHEST-precision reference.
    np.testing.assert_allclose(np.asarray(out), np.asarray(ref), rtol=5e-2, atol=5e-3)


if __name__ == "__main__":
    key = jax.random.PRNGKey(0)
    k_a, k_b, k_c = jax.random.split(key, 3)

    # Case 1: autopad needed (N % ws != 0), multiple window blocks -> exercises the
    # in-VMEM look-back carry and the look_around pad mask.
    _run_case(k_a, B=2, N=20, hidden_size=32, total_heads=4, op_heads=2,
              window_size=8, target_block_rows=16)

    # Case 2: N an exact multiple of the window -> needed_pad=False path
    # (window-0 queries attend to the -1 fill keys, as in the torch module).
    _run_case(k_b, B=1, N=32, hidden_size=32, total_heads=4, op_heads=2,
              window_size=8, target_block_rows=256)

    # Case 3: larger window / head_dim, several window blocks with default blocking.
    _run_case(k_c, B=2, N=100, hidden_size=64, total_heads=4, op_heads=4,
              window_size=16, target_block_rows=48)

    print("KERNEL_OK")
</pallas_src>

<mosaic_0001>
module attributes {stable_mosaic.version = 11 : i64} {
  func.func @_fused_local_mha_kernel(%arg0: i32, %arg1: i32, %arg2: memref<1x16x32xbf16, #tpu.memory_space<vmem>>, %arg3: memref<32x48xbf16, #tpu.memory_space<vmem>>, %arg4: memref<16x8xf32, #tpu.memory_space<vmem>>, %arg5: memref<16x8xf32, #tpu.memory_space<vmem>>, %arg6: memref<1x16x16xf32, #tpu.memory_space<vmem>>, %arg7: memref<2x24x8xbf16, #tpu.memory_space<vmem>>, %arg8: memref<2x24x8xbf16, #tpu.memory_space<vmem>>) attributes {dimension_semantics = [#tpu.dimension_semantics<parallel>, #tpu.dimension_semantics<arbitrary>], iteration_bounds = array<i64: 2, 2>, scalar_prefetch = 0 : i64, scratch_operands = 2 : i64, tpu.core_type = #tpu.core_type<tc>, window_params = [{transform_indices = @transform_0, window_bounds = array<i64: 1, 16, 32>}, {pipeline_mode = #tpu.pipeline_mode<synchronous>, transform_indices = @transform_1, window_bounds = array<i64: 32, 48>}, {transform_indices = @transform_2, window_bounds = array<i64: 16, 8>}, {transform_indices = @transform_3, window_bounds = array<i64: 16, 8>}, {transform_indices = @transform_4, window_bounds = array<i64: 1, 16, 16>}]} {
    %c0_i32 = arith.constant 0 : i32
    %0 = arith.cmpi eq, %arg1, %c0_i32 : i32
    %1 = arith.extui %0 : i1 to i32
    %c0_i32_0 = arith.constant 0 : i32
    %2 = arith.cmpi ne, %1, %c0_i32_0 : i32
    scf.if %2 {
      %cst_59 = arith.constant -1.000000e+00 : bf16
      %137 = vector.broadcast %cst_59 : bf16 to vector<2x8x8xbf16>
      %c0_60 = arith.constant 0 : index
      %c0_61 = arith.constant 0 : index
      %c0_62 = arith.constant 0 : index
      %138 = vector.load %arg7[%c0_60, %c0_61, %c0_62] : memref<2x24x8xbf16, #tpu.memory_space<vmem>>, vector<2x8x8xbf16>
      tpu.vector_store %arg7[%c0_60, %c0_61, %c0_62], %137 {strides = array<i32>} : memref<2x24x8xbf16, #tpu.memory_space<vmem>>, vector<2x8x8xbf16>,
      %cst_63 = arith.constant -1.000000e+00 : bf16
      %139 = vector.broadcast %cst_63 : bf16 to vector<2x8x8xbf16>
      %c0_64 = arith.constant 0 : index
      %c0_65 = arith.constant 0 : index
      %c0_66 = arith.constant 0 : index
      %140 = vector.load %arg8[%c0_64, %c0_65, %c0_66] : memref<2x24x8xbf16, #tpu.memory_space<vmem>>, vector<2x8x8xbf16>
      tpu.vector_store %arg8[%c0_64, %c0_65, %c0_66], %139 {strides = array<i32>} : memref<2x24x8xbf16, #tpu.memory_space<vmem>>, vector<2x8x8xbf16>,
    } else {
    }
    %c0_i32_1 = arith.constant 0 : i32
    %3 = arith.cmpi sgt, %arg1, %c0_i32_1 : i32
    %4 = arith.extui %3 : i1 to i32
    %c0_i32_2 = arith.constant 0 : i32
    %5 = arith.cmpi ne, %4, %c0_i32_2 : i32
    scf.if %5 {
      %c0_59 = arith.constant 0 : index
      %c16 = arith.constant 16 : index
      %c0_60 = arith.constant 0 : index
      %137 = vector.load %arg7[%c0_59, %c16, %c0_60] : memref<2x24x8xbf16, #tpu.memory_space<vmem>>, vector<2x8x8xbf16>
      %c0_61 = arith.constant 0 : index
      %c0_62 = arith.constant 0 : index
      %c0_63 = arith.constant 0 : index
      %138 = vector.load %arg7[%c0_61, %c0_62, %c0_63] : memref<2x24x8xbf16, #tpu.memory_space<vmem>>, vector<2x8x8xbf16>
      tpu.vector_store %arg7[%c0_61, %c0_62, %c0_63], %137 {strides = array<i32>} : memref<2x24x8xbf16, #tpu.memory_space<vmem>>, vector<2x8x8xbf16>,
      %c0_64 = arith.constant 0 : index
      %c16_65 = arith.constant 16 : index
      %c0_66 = arith.constant 0 : index
      %139 = vector.load %arg8[%c0_64, %c16_65, %c0_66] : memref<2x24x8xbf16, #tpu.memory_space<vmem>>, vector<2x8x8xbf16>
      %c0_67 = arith.constant 0 : index
      %c0_68 = arith.constant 0 : index
      %c0_69 = arith.constant 0 : index
      %140 = vector.load %arg8[%c0_67, %c0_68, %c0_69] : memref<2x24x8xbf16, #tpu.memory_space<vmem>>, vector<2x8x8xbf16>
      tpu.vector_store %arg8[%c0_67, %c0_68, %c0_69], %139 {strides = array<i32>} : memref<2x24x8xbf16, #tpu.memory_space<vmem>>, vector<2x8x8xbf16>,
    } else {
    }
    %c0 = arith.constant 0 : index
    %c0_3 = arith.constant 0 : index
    %c0_4 = arith.constant 0 : index
    %6 = vector.load %arg2[%c0, %c0_3, %c0_4] : memref<1x16x32xbf16, #tpu.memory_space<vmem>>, vector<1x16x32xbf16>
    %7 = vector.shape_cast %6 : vector<1x16x32xbf16> to vector<16x32xbf16>
    %c0_5 = arith.constant 0 : index
    %c0_6 = arith.constant 0 : index
    %8 = vector.load %arg3[%c0_5, %c0_6] : memref<32x48xbf16, #tpu.memory_space<vmem>>, vector<32x48xbf16>
    %cst = arith.constant dense<0.000000e+00> : vector<16x48xf32>
    %9 = tpu.matmul %7, %8, %cst {dimension_numbers = #tpu.dot_dimension_numbers<[1], [0], [0], [1], [0, 0, 1, 1], [], []>} : vector<16x32xbf16>, vector<32x48xbf16>, vector<16x48xf32> -> vector<16x48xf32>
    %c0_7 = arith.constant 0 : index
    %c0_8 = arith.constant 0 : index
    %10 = vector.load %arg4[%c0_7, %c0_8] : memref<16x8xf32, #tpu.memory_space<vmem>>, vector<16x8xf32>
    %c0_9 = arith.constant 0 : index
    %c0_10 = arith.constant 0 : index
    %11 = vector.load %arg5[%c0_9, %c0_10] : memref<16x8xf32, #tpu.memory_space<vmem>>, vector<16x8xf32>
    %c16_i32 = arith.constant 16 : i32
    %12 = arith.muli %arg1, %c16_i32 : i32
    %13 = tpu.iota {dimensions = array<i32: 0>} : vector<16x24xi32>
    %14 = vector.broadcast %12 : i32 to vector<16x24xi32>
    %15 = arith.addi %14, %13 : vector<16x24xi32>
    %c16_i32_11 = arith.constant 16 : i32
    %16 = arith.muli %arg1, %c16_i32_11 : i32
    %c8_i32 = arith.constant 8 : i32
    %17 = arith.subi %16, %c8_i32 : i32
    %18 = tpu.iota {dimensions = array<i32: 1>} : vector<16x24xi32>
    %19 = vector.broadcast %17 : i32 to vector<16x24xi32>
    %20 = arith.addi %19, %18 : vector<16x24xi32>
    %c0_i32_12 = arith.constant 0 : i32
    %21 = vector.broadcast %c0_i32_12 : i32 to vector<16x24xi32>
    %22 = arith.cmpi slt, %20, %21 : vector<16x24xi32>
    %c-1_i32 = arith.constant -1 : i32
    %23 = vector.broadcast %c-1_i32 : i32 to vector<16x24xi32>
    %24 = arith.select %22, %23, %20 : vector<16x24xi1>, vector<16x24xi32>
    %25 = arith.cmpi slt, %15, %24 : vector<16x24xi32>
    %c8_i32_13 = arith.constant 8 : i32
    %26 = vector.broadcast %c8_i32_13 : i32 to vector<16x24xi32>
    %27 = arith.addi %24, %26 : vector<16x24xi32>
    %28 = arith.cmpi sgt, %15, %27 : vector<16x24xi32>
    %29 = arith.ori %25, %28 : vector<16x24xi1>
    %c-1_i32_14 = arith.constant -1 : i32
    %30 = vector.broadcast %c-1_i32_14 : i32 to vector<16x24xi32>
    %31 = arith.cmpi eq, %24, %30 : vector<16x24xi32>
    %32 = arith.ori %29, %31 : vector<16x24xi1>
    %33 = vector.extract_strided_slice %9 {offsets = [0, 0], sizes = [16, 8], strides = [1, 1]} : vector<16x48xf32> to vector<16x8xf32>
    %34 = vector.extract_strided_slice %33 {offsets = [0, 4], sizes = [16, 4], strides = [1, 1]} : vector<16x8xf32> to vector<16x4xf32>
    %cst_15 = arith.constant 0.000000e+00 : f32
    %35 = vector.broadcast %cst_15 : f32 to vector<16x4xf32>
    %36 = arith.subf %35, %34 : vector<16x4xf32>
    %37 = vector.extract_strided_slice %33 {offsets = [0, 0], sizes = [16, 4], strides = [1, 1]} : vector<16x8xf32> to vector<16x4xf32>
    %38 = tpu.concatenate %36, %37 in 1 : vector<16x4xf32>, vector<16x4xf32> -> vector<16x8xf32>
    %39 = arith.mulf %33, %10 : vector<16x8xf32>
    %40 = arith.mulf %38, %11 : vector<16x8xf32>
    %41 = arith.addf %39, %40 : vector<16x8xf32>
    %42 = vector.extract_strided_slice %9 {offsets = [0, 16], sizes = [16, 8], strides = [1, 1]} : vector<16x48xf32> to vector<16x8xf32>
    %43 = vector.extract_strided_slice %42 {offsets = [0, 4], sizes = [16, 4], strides = [1, 1]} : vector<16x8xf32> to vector<16x4xf32>
    %cst_16 = arith.constant 0.000000e+00 : f32
    %44 = vector.broadcast %cst_16 : f32 to vector<16x4xf32>
    %45 = arith.subf %44, %43 : vector<16x4xf32>
    %46 = vector.extract_strided_slice %42 {offsets = [0, 0], sizes = [16, 4], strides = [1, 1]} : vector<16x8xf32> to vector<16x4xf32>
    %47 = tpu.concatenate %45, %46 in 1 : vector<16x4xf32>, vector<16x4xf32> -> vector<16x8xf32>
    %48 = arith.mulf %42, %10 : vector<16x8xf32>
    %49 = arith.mulf %47, %11 : vector<16x8xf32>
    %50 = arith.addf %48, %49 : vector<16x8xf32>
    %51 = vector.extract_strided_slice %9 {offsets = [0, 32], sizes = [16, 8], strides = [1, 1]} : vector<16x48xf32> to vector<16x8xf32>
    %52 = arith.truncf %50 : vector<16x8xf32> to vector<16x8xbf16>
    %c0_17 = arith.constant 0 : index
    %c8 = arith.constant 8 : index
    %c0_18 = arith.constant 0 : index
    %53 = vector.load %arg7[%c0_17, %c8, %c0_18] : memref<2x24x8xbf16, #tpu.memory_space<vmem>>, vector<1x16x8xbf16>
    %54 = vector.shape_cast %53 : vector<1x16x8xbf16> to vector<16x8xbf16>
    %55 = vector.shape_cast %52 : vector<16x8xbf16> to vector<1x16x8xbf16>
    tpu.vector_store %arg7[%c0_17, %c8, %c0_18], %55 {strides = array<i32>} : memref<2x24x8xbf16, #tpu.memory_space<vmem>>, vector<1x16x8xbf16>,
    %56 = arith.truncf %51 : vector<16x8xf32> to vector<16x8xbf16>
    %c0_19 = arith.constant 0 : index
    %c8_20 = arith.constant 8 : index
    %c0_21 = arith.constant 0 : index
    %57 = vector.load %arg8[%c0_19, %c8_20, %c0_21] : memref<2x24x8xbf16, #tpu.memory_space<vmem>>, vector<1x16x8xbf16>
    %58 = vector.shape_cast %57 : vector<1x16x8xbf16> to vector<16x8xbf16>
    %59 = vector.shape_cast %56 : vector<16x8xbf16> to vector<1x16x8xbf16>
    tpu.vector_store %arg8[%c0_19, %c8_20, %c0_21], %59 {strides = array<i32>} : memref<2x24x8xbf16, #tpu.memory_space<vmem>>, vector<1x16x8xbf16>,
    %c0_22 = arith.constant 0 : index
    %c0_23 = arith.constant 0 : index
    %c0_24 = arith.constant 0 : index
    %60 = vector.load %arg7[%c0_22, %c0_23, %c0_24] : memref<2x24x8xbf16, #tpu.memory_space<vmem>>, vector<1x24x8xbf16>
    %61 = vector.shape_cast %60 : vector<1x24x8xbf16> to vector<24x8xbf16>
    %c0_25 = arith.constant 0 : index
    %c0_26 = arith.constant 0 : index
    %c0_27 = arith.constant 0 : index
    %62 = vector.load %arg8[%c0_25, %c0_26, %c0_27] : memref<2x24x8xbf16, #tpu.memory_space<vmem>>, vector<1x24x8xbf16>
    %63 = vector.shape_cast %62 : vector<1x24x8xbf16> to vector<24x8xbf16>
    %64 = arith.truncf %41 : vector<16x8xf32> to vector<16x8xbf16>
    %cst_28 = arith.constant dense<0.000000e+00> : vector<16x24xf32>
    %65 = tpu.matmul %64, %61, %cst_28 {dimension_numbers = #tpu.dot_dimension_numbers<[1], [1], [0], [0], [0, 0, 1, 0], [], []>} : vector<16x8xbf16>, vector<24x8xbf16>, vector<16x24xf32> -> vector<16x24xf32>
    %cst_29 = arith.constant 0.353553385 : f32
    %66 = vector.broadcast %cst_29 : f32 to vector<16x24xf32>
    %67 = arith.mulf %65, %66 : vector<16x24xf32>
    %cst_30 = arith.constant -3.40282347E+38 : f32
    %68 = vector.broadcast %cst_30 : f32 to vector<16x24xf32>
    %69 = arith.select %32, %68, %67 : vector<16x24xi1>, vector<16x24xf32>
    %cst_31 = arith.constant dense<0xFF800000> : vector<16xf32>
    %70 = vector.multi_reduction <maximumf>, %69, %cst_31 [1] : vector<16x24xf32> to vector<16xf32>
    %71 = vector.shape_cast %70 : vector<16xf32> to vector<16x1xf32>
    %72 = vector.broadcast %71 : vector<16x1xf32> to vector<16x24xf32>
    %73 = arith.subf %69, %72 : vector<16x24xf32>
    %74 = math.exp %73 : vector<16x24xf32>
    %cst_32 = arith.constant dense<0.000000e+00> : vector<16xf32>
    %75 = vector.multi_reduction <add>, %74, %cst_32 [1] : vector<16x24xf32> to vector<16xf32>
    %76 = vector.shape_cast %75 : vector<16xf32> to vector<16x1xf32>
    %77 = arith.truncf %74 : vector<16x24xf32> to vector<16x24xbf16>
    %cst_33 = arith.constant dense<0.000000e+00> : vector<16x8xf32>
    %78 = tpu.matmul %77, %63, %cst_33 {dimension_numbers = #tpu.dot_dimension_numbers<[1], [0], [0], [1], [0, 0, 1, 1], [], []>} : vector<16x24xbf16>, vector<24x8xbf16>, vector<16x8xf32> -> vector<16x8xf32>
    %79 = tpu.reciprocal %76 {approx = true} : vector<16x1xf32> -> vector<16x1xf32>
    %80 = vector.broadcast %79 : vector<16x1xf32> to vector<16x8xf32>
    %81 = arith.mulf %78, %80 : vector<16x8xf32>
    %c0_34 = arith.constant 0 : index
    %c0_35 = arith.constant 0 : index
    %c0_36 = arith.constant 0 : index
    %82 = vector.load %arg6[%c0_34, %c0_35, %c0_36] : memref<1x16x16xf32, #tpu.memory_space<vmem>>, vector<1x16x8xf32>
    %83 = vector.shape_cast %82 : vector<1x16x8xf32> to vector<16x8xf32>
    %84 = vector.shape_cast %81 : vector<16x8xf32> to vector<1x16x8xf32>
    tpu.vector_store %arg6[%c0_34, %c0_35, %c0_36], %84 {strides = array<i32>} : memref<1x16x16xf32, #tpu.memory_space<vmem>>, vector<1x16x8xf32>,
    %85 = vector.extract_strided_slice %9 {offsets = [0, 8], sizes = [16, 8], strides = [1, 1]} : vector<16x48xf32> to vector<16x8xf32>
    %86 = vector.extract_strided_slice %85 {offsets = [0, 4], sizes = [16, 4], strides = [1, 1]} : vector<16x8xf32> to vector<16x4xf32>
    %cst_37 = arith.constant 0.000000e+00 : f32
    %87 = vector.broadcast %cst_37 : f32 to vector<16x4xf32>
    %88 = arith.subf %87, %86 : vector<16x4xf32>
    %89 = vector.extract_strided_slice %85 {offsets = [0, 0], sizes = [16, 4], strides = [1, 1]} : vector<16x8xf32> to vector<16x4xf32>
    %90 = tpu.concatenate %88, %89 in 1 : vector<16x4xf32>, vector<16x4xf32> -> vector<16x8xf32>
    %91 = arith.mulf %85, %10 : vector<16x8xf32>
    %92 = arith.mulf %90, %11 : vector<16x8xf32>
    %93 = arith.addf %91, %92 : vector<16x8xf32>
    %94 = vector.extract_strided_slice %9 {offsets = [0, 24], sizes = [16, 8], strides = [1, 1]} : vector<16x48xf32> to vector<16x8xf32>
    %95 = vector.extract_strided_slice %94 {offsets = [0, 4], sizes = [16, 4], strides = [1, 1]} : vector<16x8xf32> to vector<16x4xf32>
    %cst_38 = arith.constant 0.000000e+00 : f32
    %96 = vector.broadcast %cst_38 : f32 to vector<16x4xf32>
    %97 = arith.subf %96, %95 : vector<16x4xf32>
    %98 = vector.extract_strided_slice %94 {offsets = [0, 0], sizes = [16, 4], strides = [1, 1]} : vector<16x8xf32> to vector<16x4xf32>
    %99 = tpu.concatenate %97, %98 in 1 : vector<16x4xf32>, vector<16x4xf32> -> vector<16x8xf32>
    %100 = arith.mulf %94, %10 : vector<16x8xf32>
    %101 = arith.mulf %99, %11 : vector<16x8xf32>
    %102 = arith.addf %100, %101 : vector<16x8xf32>
    %103 = vector.extract_strided_slice %9 {offsets = [0, 40], sizes = [16, 8], strides = [1, 1]} : vector<16x48xf32> to vector<16x8xf32>
    %104 = arith.truncf %102 : vector<16x8xf32> to vector<16x8xbf16>
    %c1 = arith.constant 1 : index
    %c8_39 = arith.constant 8 : index
    %c0_40 = arith.constant 0 : index
    %105 = vector.load %arg7[%c1, %c8_39, %c0_40] : memref<2x24x8xbf16, #tpu.memory_space<vmem>>, vector<1x16x8xbf16>
    %106 = vector.shape_cast %105 : vector<1x16x8xbf16> to vector<16x8xbf16>
    %107 = vector.shape_cast %104 : vector<16x8xbf16> to vector<1x16x8xbf16>
    tpu.vector_store %arg7[%c1, %c8_39, %c0_40], %107 {strides = array<i32>} : memref<2x24x8xbf16, #tpu.memory_space<vmem>>, vector<1x16x8xbf16>,
    %108 = arith.truncf %103 : vector<16x8xf32> to vector<16x8xbf16>
    %c1_41 = arith.constant 1 : index
    %c8_42 = arith.constant 8 : index
    %c0_43 = arith.constant 0 : index
    %109 = vector.load %arg8[%c1_41, %c8_42, %c0_43] : memref<2x24x8xbf16, #tpu.memory_space<vmem>>, vector<1x16x8xbf16>
    %110 = vector.shape_cast %109 : vector<1x16x8xbf16> to vector<16x8xbf16>
    %111 = vector.shape_cast %108 : vector<16x8xbf16> to vector<1x16x8xbf16>
    tpu.vector_store %arg8[%c1_41, %c8_42, %c0_43], %111 {strides = array<i32>} : memref<2x24x8xbf16, #tpu.memory_space<vmem>>, vector<1x16x8xbf16>,
    %c1_44 = arith.constant 1 : index
    %c0_45 = arith.constant 0 : index
    %c0_46 = arith.constant 0 : index
    %112 = vector.load %arg7[%c1_44, %c0_45, %c0_46] : memref<2x24x8xbf16, #tpu.memory_space<vmem>>, vector<1x24x8xbf16>
    %113 = vector.shape_cast %112 : vector<1x24x8xbf16> to vector<24x8xbf16>
    %c1_47 = arith.constant 1 : index
    %c0_48 = arith.constant 0 : index
    %c0_49 = arith.constant 0 : index
    %114 = vector.load %arg8[%c1_47, %c0_48, %c0_49] : memref<2x24x8xbf16, #tpu.memory_space<vmem>>, vector<1x24x8xbf16>
    %115 = vector.shape_cast %114 : vector<1x24x8xbf16> to vector<24x8xbf16>
    %116 = arith.truncf %93 : vector<16x8xf32> to vector<16x8xbf16>
    %cst_50 = arith.constant dense<0.000000e+00> : vector<16x24xf32>
    %117 = tpu.matmul %116, %113, %cst_50 {dimension_numbers = #tpu.dot_dimension_numbers<[1], [1], [0], [0], [0, 0, 1, 0], [], []>} : vector<16x8xbf16>, vector<24x8xbf16>, vector<16x24xf32> -> vector<16x24xf32>
    %cst_51 = arith.constant 0.353553385 : f32
    %118 = vector.broadcast %cst_51 : f32 to vector<16x24xf32>
    %119 = arith.mulf %117, %118 : vector<16x24xf32>
    %cst_52 = arith.constant -3.40282347E+38 : f32
    %120 = vector.broadcast %cst_52 : f32 to vector<16x24xf32>
    %121 = arith.select %32, %120, %119 : vector<16x24xi1>, vector<16x24xf32>
    %cst_53 = arith.constant dense<0xFF800000> : vector<16xf32>
    %122 = vector.multi_reduction <maximumf>, %121, %cst_53 [1] : vector<16x24xf32> to vector<16xf32>
    %123 = vector.shape_cast %122 : vector<16xf32> to vector<16x1xf32>
    %124 = vector.broadcast %123 : vector<16x1xf32> to vector<16x24xf32>
    %125 = arith.subf %121, %124 : vector<16x24xf32>
    %126 = math.exp %125 : vector<16x24xf32>
    %cst_54 = arith.constant dense<0.000000e+00> : vector<16xf32>
    %127 = vector.multi_reduction <add>, %126, %cst_54 [1] : vector<16x24xf32> to vector<16xf32>
    %128 = vector.shape_cast %127 : vector<16xf32> to vector<16x1xf32>
    %129 = arith.truncf %126 : vector<16x24xf32> to vector<16x24xbf16>
    %cst_55 = arith.constant dense<0.000000e+00> : vector<16x8xf32>
    %130 = tpu.matmul %129, %115, %cst_55 {dimension_numbers = #tpu.dot_dimension_numbers<[1], [0], [0], [1], [0, 0, 1, 1], [], []>} : vector<16x24xbf16>, vector<24x8xbf16>, vector<16x8xf32> -> vector<16x8xf32>
    %131 = tpu.reciprocal %128 {approx = true} : vector<16x1xf32> -> vector<16x1xf32>
    %132 = vector.broadcast %131 : vector<16x1xf32> to vector<16x8xf32>
    %133 = arith.mulf %130, %132 : vector<16x8xf32>
    %c0_56 = arith.constant 0 : index
    %c0_57 = arith.constant 0 : index
    %c8_58 = arith.constant 8 : index
    %134 = vector.load %arg6[%c0_56, %c0_57, %c8_58] : memref<1x16x16xf32, #tpu.memory_space<vmem>>, vector<1x16x8xf32>
    %135 = vector.shape_cast %134 : vector<1x16x8xf32> to vector<16x8xf32>
    %136 = vector.shape_cast %133 : vector<16x8xf32> to vector<1x16x8xf32>
    tpu.vector_store %arg6[%c0_56, %c0_57, %c8_58], %136 {strides = array<i32>} : memref<1x16x16xf32, #tpu.memory_space<vmem>>, vector<1x16x8xf32>,
    return
  }
  func.func @transform_0(%arg0: i32, %arg1: i32) -> (i32, i32, i32) {
    %c0_i32 = arith.constant 0 : i32
    %c0_i32_0 = arith.constant 0 : i32
    return %arg0, %arg1, %c0_i32 : i32, i32, i32
  }
  func.func @transform_1(%arg0: i32, %arg1: i32) -> (i32, i32) {
    %c0_i32 = arith.constant 0 : i32
    %c0_i32_0 = arith.constant 0 : i32
    %c0_i32_1 = arith.constant 0 : i32
    return %c0_i32, %c0_i32_0 : i32, i32
  }
  func.func @transform_2(%arg0: i32, %arg1: i32) -> (i32, i32) {
    %c0_i32 = arith.constant 0 : i32
    %c0_i32_0 = arith.constant 0 : i32
    return %arg1, %c0_i32 : i32, i32
  }
  func.func @transform_3(%arg0: i32, %arg1: i32) -> (i32, i32) {
    %c0_i32 = arith.constant 0 : i32
    %c0_i32_0 = arith.constant 0 : i32
    return %arg1, %c0_i32 : i32, i32
  }
  func.func @transform_4(%arg0: i32, %arg1: i32) -> (i32, i32, i32) {
    %c0_i32 = arith.constant 0 : i32
    %c0_i32_0 = arith.constant 0 : i32
    return %arg0, %arg1, %c0_i32 : i32, i32, i32
  }
}

</mosaic_0001>

<llo_original>
// kernel: tpu_custom_call.1
$region0: #{tpu_custom_call.1}
  #allocation0 [shape = 'u32[]', space=smem, size = 0x4, offset = 0x4, fixed_abs, tag = 'smem constant byte address 0x4 - core index']
  #allocation1 [shape = 'u32[144,128]{1,0:T(1,128)}', space=vmem, size = 0x12000, scoped, tag = 'internal scratch']
  #allocation2 [shape = 'bf16[2,24,8]{2,1,0:T(8,128)(2,1)}', space=vmem, size = 0x3000, scoped, tag = 'scratch operand']
  #allocation3 [shape = 'bf16[2,24,8]{2,1,0:T(8,128)(2,1)}', space=vmem, size = 0x3000, scoped, tag = 'scratch operand']
  %s0 = inlined_call_operand.vmem [shape: bf16[2,32,32], index: 0, kind: input, shape index: {}]
  %s1 = inlined_call_operand.vmem [shape: bf16[32,48], index: 1, kind: input, shape index: {}]
  %s2 = inlined_call_operand.vmem [shape: f32[32,8], index: 2, kind: input, shape index: {}]
  %s3 = inlined_call_operand.vmem [shape: f32[32,8], index: 3, kind: input, shape index: {}]
  %s4 = inlined_call_operand.vmem [shape: f32[2,32,16], index: 4, kind: output, shape index: {}]
  %s5 = sld [smem:[#allocation0]]
  $region57: #{tpu_custom_call.1} parent=0
    _
  %s7 = ssub.s32 1, %s5
  %s8 = scalar_select 0, %s7, %s5
  loop: start=0, step=1, limit=6
  $region2: #{tpu_custom_call.1} parent=0 // loop_pre_header
    _
  $region3: #{tpu_custom_call.1} parent=0 // loop_header
    %s10 = sphi 0, %s14
    %p11 = scmp.ge.s32.totalorder %s10, 6
    %s17 = sphi 0, %s29
    %s18 = sphi 0, %s25
    %s19 = sphi 0, %s17
    %s20 = sphi 0, %s18
    %s21 = sphi 0, %s19
    %s22 = sphi 0, %s20
    %s34 = sphi 0, %s36
    %s37 = sphi 0, %s34
    %s38 = sphi 0, %s37
    %s54 = sphi 0, %s38
    %s58 = sphi 0, %s58
    %s60 = sphi 0, %s58
    %s61 = sphi 0, %s60
    %s75 = sphi 0, %s61
    %s81 = sphi 0, %s83
    %s84 = sphi 0, %s81
    %s85 = sphi 0, %s84
    %s101 = sphi 0, %s85
    %s107 = sphi 0, %s109
    %s110 = sphi 0, %s107
    %s111 = sphi 0, %s110
    %s127 = sphi 0, %s111
    %s135 = sphi 0, %s137
    %s138 = sphi 0, %s135
    %s139 = sphi 0, %s138
    %s155 = sphi 0, %s139
  $region4: #{tpu_custom_call.1} parent=0 // loop_header_branch
    %13 = sbr.rel (%p11) target = $region8
  $region5: #{tpu_custom_call.1} parent=0 // loop_body
    %s15 = ssub.s32 %s10, 1
    %s16 = ssub.s32 %s10, 2
    %s23 = sadd.s32 1, %s18
    %p24 = scmp.ge.s32.totalorder %s23, 2
    %s25 = scalar_select %p24, 0, %s23
    %s26 = sadd.s32 1, %s17
    %s27 = scalar_select %p24, %s26, %s17
    %p28 = scmp.ge.s32.totalorder %s27, 2
    %s29 = scalar_select %p28, 0, %s27
    %s30 = ssub.s32 %s17, %s29
    %s31 = ssub.s32 %s18, %s25
    %s32 = sor.u32 %s30, %s31
    %p33 = scmp.eq.s32.totalorder %s32, 0
    %s35 = sadd.s32 %s34, 1
    %s36 = scalar_select %p33, %s34, %s35
    %p39 = pneg %p33
    %p40 = scmp.eq.s32.totalorder %s10, 3
    %p41 = por %p39, %p40
    %p42 = scmp.ne.s32.totalorder %s34, %s37
    %p43 = scmp.eq.s32.totalorder %s10, 0
    %p44 = por %p42, %p43
    %p45 = scmp.ne.s32.totalorder %s34, %s37
    %p46 = scmp.eq.s32.totalorder %s15, 3
    %p47 = por %p45, %p46
    %p48 = scmp.ne.s32.totalorder %s37, %s38
    %p49 = scmp.eq.s32.totalorder %s15, 0
    %p50 = por %p48, %p49
    %p51 = scmp.ne.s32.totalorder %s37, %s38
    %p52 = scmp.eq.s32.totalorder %s16, 3
    %p53 = por %p51, %p52
    %p55 = scmp.ne.s32.totalorder %s38, %s54
    %p56 = scmp.eq.s32.totalorder %s16, 0
    %p57 = por %p55, %p56
    %s59 = sadd.s32 %s58, 1
    %p62 = scmp.eq.s32.totalorder %s10, 3
    %p63 = scmp.ne.s32.totalorder %s58, %s60
    %p64 = scmp.eq.s32.totalorder %s10, 0
    %p65 = por %p63, %p64
    %p66 = scmp.ne.s32.totalorder %s58, %s60
    %p67 = scmp.eq.s32.totalorder %s15, 3
    %p68 = por %p66, %p67
    %p69 = scmp.ne.s32.totalorder %s60, %s61
    %p70 = scmp.eq.s32.totalorder %s15, 0
    %p71 = por %p69, %p70
    %p72 = scmp.ne.s32.totalorder %s60, %s61
    %p73 = scmp.eq.s32.totalorder %s16, 3
    %p74 = por %p72, %p73
    %p76 = scmp.ne.s32.totalorder %s61, %s75
    %p77 = scmp.eq.s32.totalorder %s16, 0
    %p78 = por %p76, %p77
    %s79 = ssub.s32 %s18, %s25
    %p80 = scmp.eq.s32.totalorder %s79, 0
    %s82 = sadd.s32 %s81, 1
    %s83 = scalar_select %p80, %s81, %s82
    %p86 = pneg %p80
    %p87 = scmp.eq.s32.totalorder %s10, 3
    %p88 = por %p86, %p87
    %p89 = scmp.ne.s32.totalorder %s81, %s84
    %p90 = scmp.eq.s32.totalorder %s10, 0
    %p91 = por %p89, %p90
    %p92 = scmp.ne.s32.totalorder %s81, %s84
    %p93 = scmp.eq.s32.totalorder %s15, 3
    %p94 = por %p92, %p93
    %p95 = scmp.ne.s32.totalorder %s84, %s85
    %p96 = scmp.eq.s32.totalorder %s15, 0
    %p97 = por %p95, %p96
    %p98 = scmp.ne.s32.totalorder %s84, %s85
    %p99 = scmp.eq.s32.totalorder %s16, 3
    %p100 = por %p98, %p99
    %p102 = scmp.ne.s32.totalorder %s85, %s101
    %p103 = scmp.eq.s32.totalorder %s16, 0
    %p104 = por %p102, %p103
    %s105 = ssub.s32 %s18, %s25
    %p106 = scmp.eq.s32.totalorder %s105, 0
    %s108 = sadd.s32 %s107, 1
    %s109 = scalar_select %p106, %s107, %s108
    %p112 = pneg %p106
    %p113 = scmp.eq.s32.totalorder %s10, 3
    %p114 = por %p112, %p113
    %p115 = scmp.ne.s32.totalorder %s107, %s110
    %p116 = scmp.eq.s32.totalorder %s10, 0
    %p117 = por %p115, %p116
    %p118 = scmp.ne.s32.totalorder %s107, %s110
    %p119 = scmp.eq.s32.totalorder %s15, 3
    %p120 = por %p118, %p119
    %p121 = scmp.ne.s32.totalorder %s110, %s111
    %p122 = scmp.eq.s32.totalorder %s15, 0
    %p123 = por %p121, %p122
    %p124 = scmp.ne.s32.totalorder %s110, %s111
    %p125 = scmp.eq.s32.totalorder %s16, 3
    %p126 = por %p124, %p125
    %p128 = scmp.ne.s32.totalorder %s111, %s127
    %p129 = scmp.eq.s32.totalorder %s16, 0
    %p130 = por %p128, %p129
    %s131 = ssub.s32 %s17, %s29
    %s132 = ssub.s32 %s18, %s25
    %s133 = sor.u32 %s131, %s132
    %p134 = scmp.eq.s32.totalorder %s133, 0
    %s136 = sadd.s32 %s135, 1
    %s137 = scalar_select %p134, %s135, %s136
    %p140 = pneg %p134
    %p141 = scmp.eq.s32.totalorder %s10, 3
    %p142 = por %p140, %p141
    %p143 = scmp.ne.s32.totalorder %s135, %s138
    %p144 = scmp.eq.s32.totalorder %s10, 0
    %p145 = por %p143, %p144
    %p146 = scmp.ne.s32.totalorder %s135, %s138
    %p147 = scmp.eq.s32.totalorder %s15, 3
    %p148 = por %p146, %p147
    %p149 = scmp.ne.s32.totalorder %s138, %s139
    %p150 = scmp.eq.s32.totalorder %s15, 0
    %p151 = por %p149, %p150
    %p152 = scmp.ne.s32.totalorder %s138, %s139
    %p153 = scmp.eq.s32.totalorder %s16, 3
    %p154 = por %p152, %p153
    %p156 = scmp.ne.s32.totalorder %s139, %s155
    %p157 = scmp.eq.s32.totalorder %s16, 0
    %p158 = por %p156, %p157
    %p159 = scmp.le.s32.totalorder 1, %s10
    %p160 = scmp.lt.s32.totalorder %s10, 5
    %p161 = pnand %p159, %p160
    %p162 = pneg %p161
    // Predicated region
    $region9: #{tpu_custom_call.1} parent=5 // pred_check
      _
    $region10: #{tpu_custom_call.1} parent=5 // pred_check_branch
      %164 = sbr.rel (%p161) target = $region12
    $region11: #{tpu_custom_call.1} parent=5 // pred_region
      %s165 = ssub.s32 %s10, 1
      // Predicated region
      $region13: #{tpu_custom_call.1} parent=11 // pred_check
        %p166 = pneg %p71
      $region14: #{tpu_custom_call.1} parent=11 // pred_check_branch
        %168 = sbr.rel (%p166) target = $region16
      $region15: #{tpu_custom_call.1} parent=11 // pred_region
        _
      $region16: #{tpu_custom_call.1} parent=11 // pred_fallthru
        _
    $region12: #{tpu_custom_call.1} parent=5 // pred_fallthru
      _
    %p169 = scmp.lt.s32.totalorder %s10, 4
    // Predicated region
    $region17: #{tpu_custom_call.1} parent=5 // pred_check
      %p170 = pneg %p169
    $region18: #{tpu_custom_call.1} parent=5 // pred_check_branch
      %172 = sbr.rel (%p170) target = $region20
    $region19: #{tpu_custom_call.1} parent=5 // pred_region
      // Predicated region
      $region21: #{tpu_custom_call.1} parent=19 // pred_check
        %p173 = pneg %p44
      $region22: #{tpu_custom_call.1} parent=19 // pred_check_branch
        %175 = sbr.rel (%p173) target = $region24
      $region23: #{tpu_custom_call.1} parent=19 // pred_region
        %s176 = smul.u32 2, %s18
        %p177 = scmp.lt.s32.totalorder %s17, 1
        %s178 = scalar_select %p177, %s17, 1
        %p179 = scmp.lt.s32.totalorder %s176, 3
        %s180 = scalar_select %p179, %s176, 3
        %s181 = smul.addr %s178, 4
        %s182 = sadd.s32 %s180, %s181
        %s183 = smul.addr %s182, 4
        %s184 = scalar_lea.vmem %s0, %s183
        %s185 = smul.u32 2, %s18
      $region24: #{tpu_custom_call.1} parent=19 // pred_fallthru
        _
      // Predicated region
      $region25: #{tpu_custom_call.1} parent=19 // pred_check
        %p186 = pneg %p91
      $region26: #{tpu_custom_call.1} parent=19 // pred_check_branch
        %188 = sbr.rel (%p186) target = $region28
      $region27: #{tpu_custom_call.1} parent=19 // pred_region
        %s189 = smul.u32 2, %s18
        %p190 = scmp.lt.s32.totalorder %s189, 3
        %s191 = scalar_select %p190, %s189, 3
        %s192 = smul.addr %s191, 8
        %s193 = scalar_lea.vmem %s2, %s192
        %s194 = smul.u32 2, %s18
      $region28: #{tpu_custom_call.1} parent=19 // pred_fallthru
        _
      // Predicated region
      $region29: #{tpu_custom_call.1} parent=19 // pred_check
        %p195 = pneg %p117
      $region30: #{tpu_custom_call.1} parent=19 // pred_check_branch
        %197 = sbr.rel (%p195) target = $region32
      $region31: #{tpu_custom_call.1} parent=19 // pred_region
        %s198 = smul.u32 2, %s18
        %p199 = scmp.lt.s32.totalorder %s198, 3
        %s200 = scalar_select %p199, %s198, 3
        %s201 = smul.addr %s200, 8
        %s202 = scalar_lea.vmem %s3, %s201
        %s203 = smul.u32 2, %s18
      $region32: #{tpu_custom_call.1} parent=19 // pred_fallthru
        _
    $region20: #{tpu_custom_call.1} parent=5 // pred_fallthru
      _
    %p204 = scmp.le.s32.totalorder 1, %s10
    %p205 = scmp.lt.s32.totalorder %s10, 5
    %p206 = pnand %p204, %p205
    %p207 = pneg %p206
    // Predicated region
    $region33: #{tpu_custom_call.1} parent=5 // pred_check
      _
    $region34: #{tpu_custom_call.1} parent=5 // pred_check_branch
      %209 = sbr.rel (%p206) target = $region36
    $region35: #{tpu_custom_call.1} parent=5 // pred_region
      %s210 = ssub.s32 %s10, 1
      %s211 = smul.u32 2, %s20
      %p212 = scmp.lt.s32.totalorder %s19, 1
      %s213 = scalar_select %p212, %s19, 1
      %p214 = scmp.lt.s32.totalorder %s211, 3
      %s215 = scalar_select %p214, %s211, 3
      %s216 = smul.addr %s213, 4
      %s217 = sadd.s32 %s215, %s216
      %s218 = smul.addr %s217, 4
      %s219 = scalar_lea.vmem %s0, %s218
      %p220 = pneg %p50
      %p221 = pneg %p47
      %p222 = pneg %p71
      %p223 = pneg %p68
      %s224 = smul.u32 2, %s20
      %p225 = scmp.lt.s32.totalorder %s224, 3
      %s226 = scalar_select %p225, %s224, 3
      %s227 = smul.addr %s226, 8
      %s228 = scalar_lea.vmem %s2, %s227
      %p229 = pneg %p97
      %p230 = pneg %p94
      %s231 = smul.u32 2, %s20
      %p232 = scmp.lt.s32.totalorder %s231, 3
      %s233 = scalar_select %p232, %s231, 3
      %s234 = smul.addr %s233, 8
      %s235 = scalar_lea.vmem %s3, %s234
      %p236 = pneg %p123
      %p237 = pneg %p120
      %p238 = pneg %p151
      %p239 = pneg %p148
      %s240 = smul.u32 2, %s20
      %p241 = scmp.lt.s32.totalorder %s19, 1
      %s242 = scalar_select %p241, %s19, 1
      %p243 = scmp.lt.s32.totalorder %s240, 3
      %s244 = scalar_select %p243, %s240, 3
      %s245 = smul.addr %s242, 4
      %s246 = sadd.s32 %s244, %s245
      %s247 = smul.addr %s246, 8
      %s248 = scalar_lea.vmem %s4, %s247
      %s249 = smul.u32 2, %s20
      %p250 = scmp.lt.s32.totalorder %s19, 1
      %s251 = scalar_select %p250, %s19, 1
      %p252 = scmp.lt.s32.totalorder %s249, 3
      %s253 = scalar_select %p252, %s249, 3
      %s254 = smul.addr %s251, 4
      %s255 = sadd.s32 %s253, %s254
      %s256 = smul.addr %s255, 4
      %s257 = scalar_lea.vmem %s0, %s256
      %s258 = smul.u32 2, %s20
      %s259 = smul.u32 2, %s20
      %p260 = scmp.lt.s32.totalorder %s259, 3
      %s261 = scalar_select %p260, %s259, 3
      %s262 = smul.addr %s261, 8
      %s263 = scalar_lea.vmem %s2, %s262
      %s264 = smul.u32 2, %s20
      %s265 = smul.u32 2, %s20
      %p266 = scmp.lt.s32.totalorder %s265, 3
      %s267 = scalar_select %p266, %s265, 3
      %s268 = smul.addr %s267, 8
      %s269 = scalar_lea.vmem %s3, %s268
      %s270 = smul.u32 2, %s20
      %s271 = smul.u32 2, %s20
      %p272 = scmp.lt.s32.totalorder %s19, 1
      %s273 = scalar_select %p272, %s19, 1
      %p274 = scmp.lt.s32.totalorder %s271, 3
      %s275 = scalar_select %p274, %s271, 3
      %s276 = smul.addr %s273, 4
      %s277 = sadd.s32 %s275, %s276
      %s278 = smul.addr %s277, 8
      %s279 = scalar_lea.vmem %s4, %s278
      %s280 = smul.u32 2, %s20
      %p283 = scmp.eq.s32.totalorder %s20, 0
      // Predicated region
      $region37: #{tpu_custom_call.1} parent=35 // pred_check
        %p284 = pneg %p283
      $region38: #{tpu_custom_call.1} parent=35 // pred_check_branch
        %286 = sbr.rel (%p284) target = $region40
      $region39: #{tpu_custom_call.1} parent=35 // pred_region
        %vm287 = vcmask 60416
        %288 = vst.msk [vmem:[#allocation2] sm:$0xf] %vm287, 3212885888
        %289 = vst.msk [vmem:[#allocation2 + $0xc] sm:$0xf] %vm287, 3212885888
        %290 = vst.msk [vmem:[#allocation3] sm:$0xf] %vm287, 3212885888
        %291 = vst.msk [vmem:[#allocation3 + $0xc] sm:$0xf] %vm287, 3212885888
      $region40: #{tpu_custom_call.1} parent=35 // pred_fallthru
        _
      %p292 = scmp.gt.s32.totalorder %s20, 0
      // Predicated region
      $region41: #{tpu_custom_call.1} parent=35 // pred_check
        %p293 = pneg %p292
      $region42: #{tpu_custom_call.1} parent=35 // pred_check_branch
        %295 = sbr.rel (%p293) target = $region44
      $region43: #{tpu_custom_call.1} parent=35 // pred_region
        %v296 = vld [vmem:[#allocation2 + $0x8] sm:$0xf]
        %v297 = vld [vmem:[#allocation2 + $0x14] sm:$0xf]
        %vm298 = vcmask 60416
        %299 = vst.msk [vmem:[#allocation2] sm:$0xf] %vm298, %v296
        %300 = vst.msk [vmem:[#allocation2 + $0xc] sm:$0xf] %vm298, %v297
        %v301 = vld [vmem:[#allocation3 + $0x8] sm:$0xf]
        %v302 = vld [vmem:[#allocation3 + $0x14] sm:$0xf]
        %303 = vst.msk [vmem:[#allocation3] sm:$0xf] %vm298, %v301
        %304 = vst.msk [vmem:[#allocation3 + $0xc] sm:$0xf] %vm298, %v302
      $region44: #{tpu_custom_call.1} parent=35 // pred_fallthru
        _
      %v305 = vld [vmem:[%s257] sm:$0xf]
      %v306 = vld [vmem:[%s257 + $0x4] sm:$0xf]
      %v307 = vld [vmem:[%s1] sm:$0xf]
      %v308 = vld [vmem:[%s1 + $0x4] sm:$0xf]
      %v309 = vld [vmem:[%s1 + $0x8] sm:$0xf]
      %v310 = vld [vmem:[%s1 + $0xc] sm:$0xf]
      %v313 = vunpack.c.l.b16 %v305
      %v314 = vunpack.c.l.b16 %v306
      %v315 = vpack.c.b16 %v314, %v313
      %v320 = vunpack.c.l.b16 %v307
      %v321 = vunpack.c.l.b16 %v308
      %v322 = vunpack.c.l.b16 %v309
      %v323 = vunpack.c.l.b16 %v310
      %v324 = vpack.c.b16 %v321, %v320
      %v325 = vpack.c.b16 %v323, %v322
      %vm328 = vcmask 261120
      %v330 = vsel %vm328, %v315, 0
      %332 = vmatprep.subr.bf16.mxu0 0
      %333 = vmatpush1.bf16.msra.mxu0 %v324
      %334 = vmatprep.subr.bf16.mxu0 0
      %335 = vmatpush1.bf16.msra.mxu0 %v325
      %336 = vmatprep.subr.bf16.mxu0 0
      %337 = vmatpush1.bf16.msra.mxu0 0
      %338 = vmatprep.subr.bf16.mxu0 0
      %339 = vmatpush1.bf16.msra.mxu0 0
      %340 = vmatprep.subr.bf16.mxu0 0
      %341 = vmatpush1.bf16.msra.mxu0 0
      %342 = vmatprep.subr.bf16.mxu0 0
      %343 = vmatpush1.bf16.msra.mxu0 0
      %344 = vmatprep.subr.bf16.mxu0 0
      %345 = vmatpush1.bf16.msra.mxu0 0
      %346 = vmatprep.subr.bf16.mxu0 0
      %347 = vmatpush1.bf16.msra.mxu0 0
      %348 = vmatprep.subr.bf16.mxu0 0
      %349 = vmatpush1.bf16.msra.mxu0 0
      %350 = vmatprep.subr.bf16.mxu0 0
      %351 = vmatpush1.bf16.msra.mxu0 0
      %352 = vmatprep.subr.bf16.mxu0 0
      %353 = vmatpush1.bf16.msra.mxu0 0
      %354 = vmatprep.subr.bf16.mxu0 0
      %355 = vmatpush1.bf16.msra.mxu0 0
      %356 = vmatprep.subr.bf16.mxu0 0
      %357 = vmatpush1.bf16.msra.mxu0 0
      %358 = vmatprep.subr.bf16.mxu0 0
      %359 = vmatpush1.bf16.msra.mxu0 0
      %360 = vmatprep.subr.bf16.mxu0 0
      %361 = vmatpush1.bf16.msra.mxu0 0
      %362 = vmatprep.subr.bf16.mxu0 0
      %363 = vmatpush1.bf16.msra.mxu0 0
      %364 = vmatprep.mubr.bf16.mxu0 0
      %365 = vmatmul.mubr.bf16.gmra.mrb[0].mxu0 %v330
      %v366 = vpop.f32.mrb[0].mxu0
      %v367 = vadd.f32 0.0, %v366
      %v368 = vpop.f32.mrb[0].mxu0
      %v369 = vpop.f32.mrb[0].mxu0
      %v370 = vadd.f32 0.0, %v369
      %v371 = vpop.f32.mrb[0].mxu0
      %372 = vdwg.mxu0
      %v373 = vld [vmem:[%s263] sm:$0xff]
      %v374 = vld [vmem:[%s263 + $0x8] sm:$0xff]
      %v375 = vld [vmem:[%s269] sm:$0xff]
      %v376 = vld [vmem:[%s269 + $0x8] sm:$0xff]
      %s377 = smul.u32 %s20, 16
      %v378 = vlaneseq
      %v379 = vshrl.u32 %v378, 7
      %v380 = vadd.s32 %v379, 8
      %v381 = vstv %s377
      %v382 = vadd.s32 %v381, %v379
      %v383 = vadd.s32 %v381, %v380
      %s384 = ssub.s32 %s377, 8
      %v385 = vlaneseq
      %v386 = vand.u32 %v385, 127
      %v387 = vstv %s384
      %v388 = vadd.s32 %v387, %v386
      %vm389 = vcmp.lt.s32.totalorder %v388, 0
      %v390 = vsel %vm389, 4294967295, %v388
      %vm391 = vcmp.lt.s32.totalorder %v382, %v390
      %vm392 = vcmp.lt.s32.totalorder %v383, %v390
      %v393 = vadd.s32 %v390, 8
      %vm394 = vcmp.gt.s32.totalorder %v382, %v393
      %vm395 = vcmp.gt.s32.totalorder %v383, %v393
      %vm396 = vmor %vm391, %vm394
      %vm397 = vmor %vm392, %vm395
      %vm398 = vcmp.eq.s32.totalorder %v390, 4294967295
      %vm399 = vmor %vm396, %vm398
      %vm400 = vmor %vm397, %vm398
      %v401 = vsub.f32 0.0, %v367
      %v402 = vsub.f32 0.0, %v370
      %405 = vrot.lane.b32.xlu0 %v401, 124
      %v406 = vpop.permute.xlu0 %405
      %407 = vrot.lane.b32.xlu0 %v402, 124
      %v408 = vpop.permute.xlu0 %407
      %413 = vrot.lane.b32.xlu0 %v367, 4
      %v414 = vpop.permute.xlu0 %413
      %415 = vrot.lane.b32.xlu0 %v370, 4
      %v416 = vpop.permute.xlu0 %415
      %vm419 = vcmask 31744
      %v420 = vsel %vm419, %v406, %v414
      %v421 = vsel %vm419, %v408, %v416
      %v422 = vmul.f32 %v367, %v373
      %v423 = vmul.f32 %v370, %v374
      %v424 = vmul.f32 %v420, %v375
      %v425 = vmul.f32 %v421, %v376
      %v426 = vadd.f32 %v422, %v424
      %v427 = vadd.f32 %v423, %v425
      %428 = vrot.lane.b32.xlu0 %v401, 108
      %v429 = vpop.permute.xlu0 %428
      %430 = vrot.lane.b32.xlu0 %v402, 108
      %v431 = vpop.permute.xlu0 %430
      %434 = vrot.lane.b32.xlu0 %v367, 116
      %v435 = vpop.permute.xlu0 %434
      %436 = vrot.lane.b32.xlu0 %v370, 116
      %v437 = vpop.permute.xlu0 %436
      %v440 = vsel %vm419, %v429, %v435
      %v441 = vsel %vm419, %v431, %v437
      %444 = vrot.lane.b32.xlu0 %v373, 16
      %v445 = vpop.permute.xlu0 %444
      %446 = vrot.lane.b32.xlu0 %v374, 16
      %v447 = vpop.permute.xlu0 %446
      %v450 = vmul.f32 %v367, %v445
      %v451 = vmul.f32 %v370, %v447
      %v452 = vmul.f32 %v440, %v375
      %v453 = vmul.f32 %v441, %v376
      %456 = vrot.lane.b32.xlu0 %v452, 16
      %v457 = vpop.permute.xlu0 %456
      %458 = vrot.lane.b32.xlu0 %v453, 16
      %v459 = vpop.permute.xlu0 %458
      %v462 = vadd.f32 %v450, %v457
      %v463 = vadd.f32 %v451, %v459
      %v464 = vpack.c.bf16 %v463, %v462
      %v466 = vunpack.c.l.b16 %v464
      %v467 = vunpack.c.h.b16 %v464
      %v468 = vpack.c.b16 %v466, %v466
      %v469 = vpack.c.b16 %v467, %v467
      %470 = vrot.lane.b32.xlu0 %v468, 112
      %v471 = vpop.permute.xlu0 %470
      %472 = vrot.lane.b32.xlu0 %v469, 112
      %v473 = vpop.permute.xlu0 %472
      %vm476 = vcmask 60416
      %477 = vst.msk [vmem:[#allocation2 + $0x4] sm:$0xf] %vm476, %v471
      %478 = vst.msk [vmem:[#allocation2 + $0x8] sm:$0xf] %vm476, %v473
      %v479 = vpack.c.bf16 %v370, %v367
      %v481 = vunpack.c.l.b16 %v479
      %v482 = vunpack.c.h.b16 %v479
      %v483 = vpack.c.b16 %v481, %v481
      %v484 = vpack.c.b16 %v482, %v482
      %485 = vrot.lane.b32.xlu0 %v483, 96
      %v486 = vpop.permute.xlu0 %485
      %487 = vrot.lane.b32.xlu0 %v484, 96
      %v488 = vpop.permute.xlu0 %487
      %491 = vst.msk [vmem:[#allocation3 + $0x4] sm:$0xf] %vm476, %v486
      %492 = vst.msk [vmem:[#allocation3 + $0x8] sm:$0xf] %vm476, %v488
      %v493 = vld [vmem:[#allocation2] sm:$0xf]
      %v494 = vld [vmem:[#allocation2 + $0x4] sm:$0xf]
      %v495 = vld [vmem:[#allocation2 + $0x8] sm:$0xf]
      %v496 = vld [vmem:[#allocation3] sm:$0xf]
      %v497 = vld [vmem:[#allocation3 + $0x4] sm:$0xf]
      %v498 = vld [vmem:[#allocation3 + $0x8] sm:$0xf]
      %v499 = vpack.c.bf16 %v427, %v426
      %v503 = vunpack.c.l.b16 %v493
      %v504 = vunpack.c.l.b16 %v494
      %v505 = vunpack.c.l.b16 %v495
      %v506 = vpack.c.b16 %v504, %v503
      %v507 = vpack.c.b16 %v505, %v505
      %vm508 = vcmask 64512
      %v510 = vsel %vm508, %v499, 0
      %v513 = vsel %vm508, %v506, 0
      %v516 = vsel %vm508, %v507, 0
      %518 = vmatprep.subr.bf16.mxu0 0
      %519 = vmatpush1.bf16.xpose.msra.mxu0 %v513
      %520 = vmatprep.subr.bf16.mxu0 0
      %521 = vmatpush1.bf16.xpose.msra.mxu0 %v516
      %522 = vmatprep.subr.bf16.mxu0 0
      %523 = vmatpush1.bf16.xpose.msra.mxu0 0
      %524 = vmatprep.subr.bf16.mxu0 0
      %525 = vmatpush1.bf16.xpose.msra.mxu0 0
      %526 = vmatprep.subr.bf16.mxu0 0
      %527 = vmatpush1.bf16.xpose.msra.mxu0 0
      %528 = vmatprep.subr.bf16.mxu0 0
      %529 = vmatpush1.bf16.xpose.msra.mxu0 0
      %530 = vmatprep.subr.bf16.mxu0 0
      %531 = vmatpush1.bf16.xpose.msra.mxu0 0
      %532 = vmatprep.subr.bf16.mxu0 0
      %533 = vmatpush1.bf16.xpose.msra.mxu0 0
      %534 = vmatprep.subr.bf16.mxu0 0
      %535 = vmatpush1.bf16.xpose.msra.mxu0 0
      %536 = vmatprep.subr.bf16.mxu0 0
      %537 = vmatpush1.bf16.xpose.msra.mxu0 0
      %538 = vmatprep.subr.bf16.mxu0 0
      %539 = vmatpush1.bf16.xpose.msra.mxu0 0
      %540 = vmatprep.subr.bf16.mxu0 0
      %541 = vmatpush1.bf16.xpose.msra.mxu0 0
      %542 = vmatprep.subr.bf16.mxu0 0
      %543 = vmatpush1.bf16.xpose.msra.mxu0 0
      %544 = vmatprep.subr.bf16.mxu0 0
      %545 = vmatpush1.bf16.xpose.msra.mxu0 0
      %546 = vmatprep.subr.bf16.mxu0 0
      %547 = vmatpush1.bf16.xpose.msra.mxu0 0
      %548 = vmatprep.subr.bf16.mxu0 0
      %549 = vmatpush1.bf16.xpose.msra.mxu0 0
      %550 = vmatprep.mubr.bf16.mxu0 0
      %551 = vmatmul.mubr.bf16.gmra.mrb[0].mxu0 %v510
      %v552 = vpop.f32.mrb[0].mxu0
      %v553 = vadd.f32 0.0, %v552
      %v554 = vpop.f32.mrb[0].mxu0
      %v555 = vpop.f32.mrb[0].mxu0
      %v556 = vadd.f32 0.0, %v555
      %v557 = vpop.f32.mrb[0].mxu0
      %558 = vdwg.mxu0
      %v559 = vmul.f32 %v553, 0.35355338
      %v560 = vmul.f32 %v556, 0.35355338
      %v561 = vsel %vm399, -3.4028235e+38, %v559
      %v562 = vsel %vm400, -3.4028235e+38, %v560
      %vm563 = vcmask 195584
      %v564 = vsel %vm563, %v561, -inf
      %565 = vmax.xlane.f32.xlu0 %v564
      %v566 = vpop.xlane.xlu0 %565
      %v567 = vsel %vm563, %v562, -inf
      %568 = vmax.xlane.f32.xlu0 %v567
      %v569 = vpop.xlane.xlu0 %568
      %v570 = vsub.f32 %v561, %v566
      %v571 = vsub.f32 %v562, %v569
      %v572 = vmul.f32 %v570, 1.442695
      %v573 = vpow.pop %v572
      %v574 = vmul.f32 %v571, 1.442695
      %v575 = vpow.pop %v574
      %v576 = vsel %vm563, %v573, 0.0
      %577 = vadd.xlane.f32.xlu0 %v576
      %v578 = vpop.xlane.xlu0 %577
      %v579 = vsel %vm563, %v575, 0.0
      %580 = vadd.xlane.f32.xlu0 %v579
      %v581 = vpop.xlane.xlu0 %580
      %v582 = vpack.c.bf16 %v575, %v573
      %v586 = vunpack.c.l.b16 %v496
      %v587 = vunpack.c.l.b16 %v497
      %v588 = vunpack.c.l.b16 %v498
      %v589 = vpack.c.b16 %v587, %v586
      %v590 = vpack.c.b16 %v588, %v588
      %v593 = vsel %vm563, %v582, 0
      %vm595 = vcmask 1043456
      %v597 = vsel %vm595, %v590, 0
      %599 = vmatprep.subr.bf16.mxu0 0
      %600 = vmatpush1.bf16.msra.mxu0 %v589
      %601 = vmatprep.subr.bf16.mxu0 0
      %602 = vmatpush1.bf16.msra.mxu0 %v597
      %603 = vmatprep.subr.bf16.mxu0 0
      %604 = vmatpush1.bf16.msra.mxu0 0
      %605 = vmatprep.subr.bf16.mxu0 0
      %606 = vmatpush1.bf16.msra.mxu0 0
      %607 = vmatprep.subr.bf16.mxu0 0
      %608 = vmatpush1.bf16.msra.mxu0 0
      %609 = vmatprep.subr.bf16.mxu0 0
      %610 = vmatpush1.bf16.msra.mxu0 0
      %611 = vmatprep.subr.bf16.mxu0 0
      %612 = vmatpush1.bf16.msra.mxu0 0
      %613 = vmatprep.subr.bf16.mxu0 0
      %614 = vmatpush1.bf16.msra.mxu0 0
      %615 = vmatprep.subr.bf16.mxu0 0
      %616 = vmatpush1.bf16.msra.mxu0 0
      %617 = vmatprep.subr.bf16.mxu0 0
      %618 = vmatpush1.bf16.msra.mxu0 0
      %619 = vmatprep.subr.bf16.mxu0 0
      %620 = vmatpush1.bf16.msra.mxu0 0
      %621 = vmatprep.subr.bf16.mxu0 0
      %622 = vmatpush1.bf16.msra.mxu0 0
      %623 = vmatprep.subr.bf16.mxu0 0
      %624 = vmatpush1.bf16.msra.mxu0 0
      %625 = vmatprep.subr.bf16.mxu0 0
      %626 = vmatpush1.bf16.msra.mxu0 0
      %627 = vmatprep.subr.bf16.mxu0 0
      %628 = vmatpush1.bf16.msra.mxu0 0
      %629 = vmatprep.subr.bf16.mxu0 0
      %630 = vmatpush1.bf16.msra.mxu0 0
      %631 = vmatprep.mubr.bf16.mxu0 0
      %632 = vmatmul.mubr.bf16.gmra.mrb[0].mxu0 %v593
      %v633 = vpop.f32.mrb[0].mxu0
      %v634 = vadd.f32 0.0, %v633
      %v635 = vpop.f32.mrb[0].mxu0
      %v636 = vpop.f32.mrb[0].mxu0
      %v637 = vadd.f32 0.0, %v636
      %v638 = vpop.f32.mrb[0].mxu0
      %639 = vdwg.mxu0
      %v640 = vrcp.pop %v578
      %v641 = vrcp.pop %v581
      %v642 = vmul.f32 %v634, %v640
      %v643 = vmul.f32 %v637, %v641
      %644 = vst.msk [vmem:[%s279] sm:$0xff] %vm508, %v642
      %645 = vst.msk [vmem:[%s279 + $0x8] sm:$0xff] %vm508, %v643
      %646 = vrot.lane.b32.xlu0 %v401, 116
      %v647 = vpop.permute.xlu0 %646
      %648 = vrot.lane.b32.xlu0 %v402, 116
      %v649 = vpop.permute.xlu0 %648
      %652 = vrot.lane.b32.xlu0 %v367, 124
      %v653 = vpop.permute.xlu0 %652
      %654 = vrot.lane.b32.xlu0 %v370, 124
      %v655 = vpop.permute.xlu0 %654
      %v658 = vsel %vm419, %v647, %v653
      %v659 = vsel %vm419, %v649, %v655
      %660 = vrot.lane.b32.xlu0 %v373, 8
      %v661 = vpop.permute.xlu0 %660
      %662 = vrot.lane.b32.xlu0 %v374, 8
      %v663 = vpop.permute.xlu0 %662
      %v666 = vmul.f32 %v367, %v661
      %v667 = vmul.f32 %v370, %v663
      %v668 = vmul.f32 %v658, %v375
      %v669 = vmul.f32 %v659, %v376
      %672 = vrot.lane.b32.xlu0 %v668, 8
      %v673 = vpop.permute.xlu0 %672
      %674 = vrot.lane.b32.xlu0 %v669, 8
      %v675 = vpop.permute.xlu0 %674
      %v678 = vadd.f32 %v666, %v673
      %v679 = vadd.f32 %v667, %v675
      %680 = vrot.lane.b32.xlu0 %v401, 100
      %v681 = vpop.permute.xlu0 %680
      %682 = vrot.lane.b32.xlu0 %v402, 100
      %v683 = vpop.permute.xlu0 %682
      %686 = vrot.lane.b32.xlu0 %v367, 108
      %v687 = vpop.permute.xlu0 %686
      %688 = vrot.lane.b32.xlu0 %v370, 108
      %v689 = vpop.permute.xlu0 %688
      %v692 = vsel %vm419, %v681, %v687
      %v693 = vsel %vm419, %v683, %v689
      %694 = vrot.lane.b32.xlu0 %v373, 24
      %v695 = vpop.permute.xlu0 %694
      %696 = vrot.lane.b32.xlu0 %v374, 24
      %v697 = vpop.permute.xlu0 %696
      %v700 = vmul.f32 %v367, %v695
      %v701 = vmul.f32 %v370, %v697
      %v702 = vmul.f32 %v692, %v375
      %v703 = vmul.f32 %v693, %v376
      %706 = vrot.lane.b32.xlu0 %v702, 24
      %v707 = vpop.permute.xlu0 %706
      %708 = vrot.lane.b32.xlu0 %v703, 24
      %v709 = vpop.permute.xlu0 %708
      %v712 = vadd.f32 %v700, %v707
      %v713 = vadd.f32 %v701, %v709
      %v714 = vpack.c.bf16 %v713, %v712
      %v716 = vunpack.c.l.b16 %v714
      %v717 = vunpack.c.h.b16 %v714
      %v718 = vpack.c.b16 %v716, %v716
      %v719 = vpack.c.b16 %v717, %v717
      %720 = vrot.lane.b32.xlu0 %v718, 104
      %v721 = vpop.permute.xlu0 %720
      %722 = vrot.lane.b32.xlu0 %v719, 104
      %v723 = vpop.permute.xlu0 %722
      %s726 = scalar_lea.vmem [#allocation2], 12
      %727 = vst.msk [vmem:[%s726 + $0x4] sm:$0xf] %vm476, %v721
      %728 = vst.msk [vmem:[%s726 + $0x8] sm:$0xf] %vm476, %v723
      %729 = vrot.lane.b32.xlu0 %v483, 88
      %v730 = vpop.permute.xlu0 %729
      %731 = vrot.lane.b32.xlu0 %v484, 88
      %v732 = vpop.permute.xlu0 %731
      %s735 = scalar_lea.vmem [#allocation3], 12
      %736 = vst.msk [vmem:[%s735 + $0x4] sm:$0xf] %vm476, %v730
      %737 = vst.msk [vmem:[%s735 + $0x8] sm:$0xf] %vm476, %v732
      %v738 = vld [vmem:[%s726] sm:$0xf]
      %v739 = vld [vmem:[%s726 + $0x4] sm:$0xf]
      %v740 = vld [vmem:[%s726 + $0x8] sm:$0xf]
      %v741 = vld [vmem:[%s735] sm:$0xf]
      %v742 = vld [vmem:[%s735 + $0x4] sm:$0xf]
      %v743 = vld [vmem:[%s735 + $0x8] sm:$0xf]
      %v744 = vpack.c.bf16 %v679, %v678
      %746 = vrot.lane.b32.xlu0 %v744, 120
      %v747 = vpop.permute.xlu0 %746
      %v751 = vunpack.c.l.b16 %v738
      %v752 = vunpack.c.l.b16 %v739
      %v753 = vunpack.c.l.b16 %v740
      %v754 = vpack.c.b16 %v752, %v751
      %v755 = vpack.c.b16 %v753, %v753
      %v757 = vsel %vm508, %v747, 0
      %v760 = vsel %vm508, %v754, 0
      %v763 = vsel %vm508, %v755, 0
      %765 = vmatprep.subr.bf16.mxu0 0
      %766 = vmatpush1.bf16.xpose.msra.mxu0 %v760
      %767 = vmatprep.subr.bf16.mxu0 0
      %768 = vmatpush1.bf16.xpose.msra.mxu0 %v763
      %769 = vmatprep.subr.bf16.mxu0 0
      %770 = vmatpush1.bf16.xpose.msra.mxu0 0
      %771 = vmatprep.subr.bf16.mxu0 0
      %772 = vmatpush1.bf16.xpose.msra.mxu0 0
      %773 = vmatprep.subr.bf16.mxu0 0
      %774 = vmatpush1.bf16.xpose.msra.mxu0 0
      %775 = vmatprep.subr.bf16.mxu0 0
      %776 = vmatpush1.bf16.xpose.msra.mxu0 0
      %777 = vmatprep.subr.bf16.mxu0 0
      %778 = vmatpush1.bf16.xpose.msra.mxu0 0
      %779 = vmatprep.subr.bf16.mxu0 0
      %780 = vmatpush1.bf16.xpose.msra.mxu0 0
      %781 = vmatprep.subr.bf16.mxu0 0
      %782 = vmatpush1.bf16.xpose.msra.mxu0 0
      %783 = vmatprep.subr.bf16.mxu0 0
      %784 = vmatpush1.bf16.xpose.msra.mxu0 0
      %785 = vmatprep.subr.bf16.mxu0 0
      %786 = vmatpush1.bf16.xpose.msra.mxu0 0
      %787 = vmatprep.subr.bf16.mxu0 0
      %788 = vmatpush1.bf16.xpose.msra.mxu0 0
      %789 = vmatprep.subr.bf16.mxu0 0
      %790 = vmatpush1.bf16.xpose.msra.mxu0 0
      %791 = vmatprep.subr.bf16.mxu0 0
      %792 = vmatpush1.bf16.xpose.msra.mxu0 0
      %793 = vmatprep.subr.bf16.mxu0 0
      %794 = vmatpush1.bf16.xpose.msra.mxu0 0
      %795 = vmatprep.subr.bf16.mxu0 0
      %796 = vmatpush1.bf16.xpose.msra.mxu0 0
      %797 = vmatprep.mubr.bf16.mxu0 0
      %798 = vmatmul.mubr.bf16.gmra.mrb[0].mxu0 %v757
      %v799 = vpop.f32.mrb[0].mxu0
      %v800 = vadd.f32 0.0, %v799
      %v801 = vpop.f32.mrb[0].mxu0
      %v802 = vpop.f32.mrb[0].mxu0
      %v803 = vadd.f32 0.0, %v802
      %v804 = vpop.f32.mrb[0].mxu0
      %805 = vdwg.mxu0
      %v806 = vmul.f32 %v800, 0.35355338
      %v807 = vmul.f32 %v803, 0.35355338
      %v808 = vsel %vm399, -3.4028235e+38, %v806
      %v809 = vsel %vm400, -3.4028235e+38, %v807
      %v810 = vsel %vm563, %v808, -inf
      %811 = vmax.xlane.f32.xlu0 %v810
      %v812 = vpop.xlane.xlu0 %811
      %v813 = vsel %vm563, %v809, -inf
      %814 = vmax.xlane.f32.xlu0 %v813
      %v815 = vpop.xlane.xlu0 %814
      %v816 = vsub.f32 %v808, %v812
      %v817 = vsub.f32 %v809, %v815
      %v818 = vmul.f32 %v816, 1.442695
      %v819 = vpow.pop %v818
      %v820 = vmul.f32 %v817, 1.442695
      %v821 = vpow.pop %v820
      %v822 = vsel %vm563, %v819, 0.0
      %823 = vadd.xlane.f32.xlu0 %v822
      %v824 = vpop.xlane.xlu0 %823
      %v825 = vsel %vm563, %v821, 0.0
      %826 = vadd.xlane.f32.xlu0 %v825
      %v827 = vpop.xlane.xlu0 %826
      %v828 = vpack.c.bf16 %v821, %v819
      %v832 = vunpack.c.l.b16 %v741
      %v833 = vunpack.c.l.b16 %v742
      %v834 = vunpack.c.l.b16 %v743
      %v835 = vpack.c.b16 %v833, %v832
      %v836 = vpack.c.b16 %v834, %v834
      %v839 = vsel %vm563, %v828, 0
      %v842 = vsel %vm595, %v836, 0
      %844 = vmatprep.subr.bf16.mxu0 0
      %845 = vmatpush1.bf16.msra.mxu0 %v835
      %846 = vmatprep.subr.bf16.mxu0 0
      %847 = vmatpush1.bf16.msra.mxu0 %v842
      %848 = vmatprep.subr.bf16.mxu0 0
      %849 = vmatpush1.bf16.msra.mxu0 0
      %850 = vmatprep.subr.bf16.mxu0 0
      %851 = vmatpush1.bf16.msra.mxu0 0
      %852 = vmatprep.subr.bf16.mxu0 0
      %853 = vmatpush1.bf16.msra.mxu0 0
      %854 = vmatprep.subr.bf16.mxu0 0
      %855 = vmatpush1.bf16.msra.mxu0 0
      %856 = vmatprep.subr.bf16.mxu0 0
      %857 = vmatpush1.bf16.msra.mxu0 0
      %858 = vmatprep.subr.bf16.mxu0 0
      %859 = vmatpush1.bf16.msra.mxu0 0
      %860 = vmatprep.subr.bf16.mxu0 0
      %861 = vmatpush1.bf16.msra.mxu0 0
      %862 = vmatprep.subr.bf16.mxu0 0
      %863 = vmatpush1.bf16.msra.mxu0 0
      %864 = vmatprep.subr.bf16.mxu0 0
      %865 = vmatpush1.bf16.msra.mxu0 0
      %866 = vmatprep.subr.bf16.mxu0 0
      %867 = vmatpush1.bf16.msra.mxu0 0
      %868 = vmatprep.subr.bf16.mxu0 0
      %869 = vmatpush1.bf16.msra.mxu0 0
      %870 = vmatprep.subr.bf16.mxu0 0
      %871 = vmatpush1.bf16.msra.mxu0 0
      %872 = vmatprep.subr.bf16.mxu0 0
      %873 = vmatpush1.bf16.msra.mxu0 0
      %874 = vmatprep.subr.bf16.mxu0 0
      %875 = vmatpush1.bf16.msra.mxu0 0
      %876 = vmatprep.mubr.bf16.mxu0 0
      %877 = vmatmul.mubr.bf16.gmra.mrb[0].mxu0 %v839
      %v878 = vpop.f32.mrb[0].mxu0
      %v879 = vadd.f32 0.0, %v878
      %v880 = vpop.f32.mrb[0].mxu0
      %v881 = vpop.f32.mrb[0].mxu0
      %v882 = vadd.f32 0.0, %v881
      %v883 = vpop.f32.mrb[0].mxu0
      %884 = vdwg.mxu0
      %v885 = vrcp.pop %v824
      %v886 = vrcp.pop %v827
      %v887 = vmul.f32 %v879, %v885
      %v888 = vmul.f32 %v882, %v886
      %891 = vrot.lane.b32.xlu0 %v887, 8
      %v892 = vpop.permute.xlu0 %891
      %893 = vrot.lane.b32.xlu0 %v888, 8
      %v894 = vpop.permute.xlu0 %893
      %vm897 = vcmask 130112
      %898 = vst.msk [vmem:[%s279] sm:$0xff] %vm897, %v892
      %899 = vst.msk [vmem:[%s279 + $0x8] sm:$0xff] %vm897, %v894
      %s900 = smul.u32 2, %s20
      %p901 = scmp.lt.s32.totalorder %s19, 1
      %s902 = scalar_select %p901, %s19, 1
      %p903 = scmp.lt.s32.totalorder %s900, 3
      %s904 = scalar_select %p903, %s900, 3
      %s905 = smul.addr %s902, 4
      %s906 = sadd.s32 %s904, %s905
      %s907 = smul.addr %s906, 8
      %s908 = scalar_lea.vmem %s4, %s907
      // Predicated region
      $region45: #{tpu_custom_call.1} parent=35 // pred_check
        %p909 = pneg %p148
      $region46: #{tpu_custom_call.1} parent=35 // pred_check_branch
        %911 = sbr.rel (%p909) target = $region48
      $region47: #{tpu_custom_call.1} parent=35 // pred_region
        %s912 = smul.u32 2, %s20
      $region48: #{tpu_custom_call.1} parent=35 // pred_fallthru
        _
    $region36: #{tpu_custom_call.1} parent=5 // pred_fallthru
      _
    %p913 = scmp.le.s32.totalorder 2, %s10
    // Predicated region
    $region49: #{tpu_custom_call.1} parent=5 // pred_check
      %p914 = pneg %p913
    $region50: #{tpu_custom_call.1} parent=5 // pred_check_branch
      %916 = sbr.rel (%p914) target = $region52
    $region51: #{tpu_custom_call.1} parent=5 // pred_region
      %s917 = ssub.s32 %s10, 2
      // Predicated region
      $region53: #{tpu_custom_call.1} parent=51 // pred_check
        %p918 = pneg %p154
      $region54: #{tpu_custom_call.1} parent=51 // pred_check_branch
        %920 = sbr.rel (%p918) target = $region56
      $region55: #{tpu_custom_call.1} parent=51 // pred_region
        %s921 = smul.u32 2, %s22
        %p922 = scmp.lt.s32.totalorder %s21, 1
        %s923 = scalar_select %p922, %s21, 1
        %p924 = scmp.lt.s32.totalorder %s921, 3
        %s925 = scalar_select %p924, %s921, 3
        %s926 = smul.addr %s923, 4
        %s927 = sadd.s32 %s925, %s926
        %s928 = smul.addr %s927, 8
        %s929 = scalar_lea.vmem %s4, %s928
      $region56: #{tpu_custom_call.1} parent=51 // pred_fallthru
        _
    $region52: #{tpu_custom_call.1} parent=5 // pred_fallthru
      _
  $region6: #{tpu_custom_call.1} parent=0 // loop_footer
    %s14 = sadd.s32 1, %s10
  $region7: #{tpu_custom_call.1} parent=0 // loop_footer_branch
    %9 = sbr.rel target = $region3
  $region8: #{tpu_custom_call.1} parent=0 // loop_exit
    _

</llo_original>
